<compile_context>
chip_gen: v5e
topology: v5e:2x2
jax: 0.10.0
libtpu: 0.0.40
codegen_flags: <defaults>
</compile_context>

<pallas_src>
import jax
import jax.numpy as jnp
import numpy as np
from jax.experimental import pallas as pl
from jax.experimental.pallas import tpu as pltpu


def _round_up(x: int, m: int) -> int:
    return ((x + m - 1) // m) * m


# ----------------------------------------------------------------------------
# Kernel: one (tm, 256) logits tile per grid step; full-K dot against the
# VMEM-resident [H, E] weight. bf16 MXU feed, f32 accumulation.
# ----------------------------------------------------------------------------
def _moe_gate_kernel(x_ref, w_ref, o_ref):
    x = x_ref[...].astype(jnp.bfloat16)  # in-kernel cast (VPU, hidden under DMA/MXU)
    o_ref[...] = jnp.dot(
        x, w_ref[...], preferred_element_type=jnp.float32
    ).astype(o_ref.dtype)


# ----------------------------------------------------------------------------
# One-time weight preparation (weight-load time in a real deployment):
# PyTorch layout [E, H] -> lane-dense [H, E] in bf16.
# ----------------------------------------------------------------------------
def prepare_gate_weight(weight):
    return jnp.asarray(weight, jnp.bfloat16).T


def _vmem_capacity_bytes() -> int:
    try:
        return int(pltpu.get_tpu_info().vmem_capacity_bytes)
    except Exception:
        return 64 * 1024 * 1024  # conservative fallback (v7x per-TC VMEM)


def _pick_tm(H, E, x_bytes, o_bytes, w_bytes, vmem_cap) -> int:
    # Footprint: weight (2 pipeline buffers even though it is DMA'd once)
    #          + double-buffered x tile + double-buffered output tile.
    weight_bytes = 2 * H * E * w_bytes
    per_row = 2 * H * x_bytes + 2 * E * o_bytes
    budget = min(int(vmem_cap * 0.55), vmem_cap - 8 * 1024 * 1024)
    tm_cap = max(8, (budget - weight_bytes) // per_row)
    for cand in (1024, 512, 256, 128, 64, 32, 16, 8):
        if cand <= tm_cap:
            return cand
    return 8


# ----------------------------------------------------------------------------
# Wrapper: logits = hidden_states @ weight_t   (== F.linear(x, weight), no bias)
#   hidden_states : [T, H]  (any float dtype; cast to bf16 inside the kernel)
#   weight_t      : [H, E]  bf16, from prepare_gate_weight()
# ----------------------------------------------------------------------------
def moe_gate_logits(hidden_states, weight_t, *, tm=None, out_dtype=jnp.float32):
    T, H = hidden_states.shape
    H2, E = weight_t.shape
    assert H == H2, "hidden_size mismatch between activations and gate weight"
    assert E % 128 == 0, "expert axis must be lane-dense (multiple of 128)"

    x_b = jnp.dtype(hidden_states.dtype).itemsize
    o_b = jnp.dtype(out_dtype).itemsize
    w_b = jnp.dtype(weight_t.dtype).itemsize

    vmem_cap = _vmem_capacity_bytes()
    if tm is None:
        tm = _pick_tm(H, E, x_b, o_b, w_b, vmem_cap)
    tm = max(8, min(tm, _round_up(T, 8)))
    tm = _round_up(tm, 8)

    grid = (pl.cdiv(T, tm),)

    vmem_need = (2 * H * E * w_b        # resident weight (2 pipeline buffers)
                 + 2 * tm * H * x_b     # x tile, double-buffered
                 + 2 * tm * E * o_b     # out tile, double-buffered
                 + tm * E * 4)          # f32 matmul accumulator headroom
    vmem_limit = int(min(max(int(vmem_need * 1.25) + (2 << 20), 32 << 20), vmem_cap))

    cost = pl.CostEstimate(
        flops=2 * T * E * H,
        transcendentals=0,
        bytes_accessed=T * H * x_b + H * E * w_b + T * E * o_b,
    )

    return pl.pallas_call(
        _moe_gate_kernel,
        out_shape=jax.ShapeDtypeStruct((T, E), out_dtype),
        grid_spec=pltpu.PrefetchScalarGridSpec(
            num_scalar_prefetch=0,
            grid=grid,
            in_specs=[
                pl.BlockSpec((tm, H), lambda i: (i, 0)),   # activation M-tile
                pl.BlockSpec((H, E), lambda i: (0, 0)),    # full weight, constant -> fetched once
            ],
            out_specs=pl.BlockSpec((tm, E), lambda i: (i, 0)),
        ),
        compiler_params=pltpu.CompilerParams(
            dimension_semantics=("parallel",),
            vmem_limit_bytes=vmem_limit,
        ),
        cost_estimate=cost,
    )(hidden_states, weight_t)


# ----------------------------------------------------------------------------
# Pure-JAX reference (same bf16 feed / f32 accumulate semantics)
# ----------------------------------------------------------------------------
def _reference_logits(hidden_states, weight):
    return jnp.dot(
        hidden_states.astype(jnp.bfloat16),
        weight.astype(jnp.bfloat16).T,
        preferred_element_type=jnp.float32,
    )


# ----------------------------------------------------------------------------
# main
# ----------------------------------------------------------------------------
if __name__ == "__main__":
    key = jax.random.PRNGKey(0)
    k_x, k_w, k_x2 = jax.random.split(key, 3)

    n_routed_experts = 256        # fixed inside MoEGate
    hidden_size = 512             # small config.hidden_size
    num_tokens = 256              # flattened-token batch

    weight = (0.02 * jax.random.normal(
        k_w, (n_routed_experts, hidden_size))).astype(jnp.float32)
    hidden_states = jax.random.normal(
        k_x, (num_tokens, hidden_size), dtype=jnp.float32)

    # One-time weight prep (would happen at weight-load time in a deployment).
    weight_t = jax.block_until_ready(prepare_gate_weight(weight))

    # aligned token count
    logits = jax.block_until_ready(moe_gate_logits(hidden_states, weight_t))
    assert logits.shape == (num_tokens, n_routed_experts)
    assert bool(jnp.all(jnp.isfinite(logits)))
    ref = _reference_logits(hidden_states, weight)
    np.testing.assert_allclose(np.asarray(logits), np.asarray(ref),
                               rtol=2e-2, atol=2e-2)

    # un-aligned token count (exercises Pallas edge-block masking; no wrapper pad)
    hs_small = jax.random.normal(k_x2, (13, hidden_size), dtype=jnp.float32)
    logits_small = jax.block_until_ready(moe_gate_logits(hs_small, weight_t))
    assert logits_small.shape == (13, n_routed_experts)
    assert bool(jnp.all(jnp.isfinite(logits_small)))
    ref_small = _reference_logits(hs_small, weight)
    np.testing.assert_allclose(np.asarray(logits_small), np.asarray(ref_small),
                               rtol=2e-2, atol=2e-2)

    print("KERNEL_OK")
</pallas_src>

<mosaic_0001>
module attributes {stable_mosaic.version = 11 : i64} {
  func.func @_moe_gate_kernel(%arg0: i32, %arg1: memref<256x512xf32, #tpu.memory_space<vmem>>, %arg2: memref<512x256xbf16, #tpu.memory_space<vmem>>, %arg3: memref<256x256xf32, #tpu.memory_space<vmem>>) attributes {dimension_semantics = [#tpu.dimension_semantics<parallel>], iteration_bounds = array<i64: 1>, scalar_prefetch = 0 : i64, scratch_operands = 0 : i64, tpu.core_type = #tpu.core_type<tc>, window_params = [{transform_indices = @transform_0, window_bounds = array<i64: 256, 512>}, {pipeline_mode = #tpu.pipeline_mode<synchronous>, transform_indices = @transform_1, window_bounds = array<i64: 512, 256>}, {transform_indices = @transform_2, window_bounds = array<i64: 256, 256>}]} {
    %c0 = arith.constant 0 : index
    %c0_0 = arith.constant 0 : index
    %0 = vector.load %arg1[%c0, %c0_0] : memref<256x512xf32, #tpu.memory_space<vmem>>, vector<256x512xf32>
    %1 = arith.truncf %0 : vector<256x512xf32> to vector<256x512xbf16>
    %c0_1 = arith.constant 0 : index
    %c0_2 = arith.constant 0 : index
    %2 = vector.load %arg2[%c0_1, %c0_2] : memref<512x256xbf16, #tpu.memory_space<vmem>>, vector<512x256xbf16>
    %cst = arith.constant dense<0.000000e+00> : vector<256x256xf32>
    %3 = tpu.matmul %1, %2, %cst {dimension_numbers = #tpu.dot_dimension_numbers<[1], [0], [0], [1], [0, 0, 1, 1], [], []>} : vector<256x512xbf16>, vector<512x256xbf16>, vector<256x256xf32> -> vector<256x256xf32>
    %c0_3 = arith.constant 0 : index
    %c0_4 = arith.constant 0 : index
    %4 = vector.load %arg3[%c0_3, %c0_4] : memref<256x256xf32, #tpu.memory_space<vmem>>, vector<256x256xf32>
    tpu.vector_store %arg3[%c0_3, %c0_4], %3 {strides = array<i32>} : memref<256x256xf32, #tpu.memory_space<vmem>>, vector<256x256xf32>,
    return
  }
  func.func @transform_0(%arg0: i32) -> (i32, i32) {
    %c0_i32 = arith.constant 0 : i32
    %c0_i32_0 = arith.constant 0 : i32
    return %arg0, %c0_i32 : i32, i32
  }
  func.func @transform_1(%arg0: i32) -> (i32, i32) {
    %c0_i32 = arith.constant 0 : i32
    %c0_i32_0 = arith.constant 0 : i32
    %c0_i32_1 = arith.constant 0 : i32
    return %c0_i32, %c0_i32_0 : i32, i32
  }
  func.func @transform_2(%arg0: i32) -> (i32, i32) {
    %c0_i32 = arith.constant 0 : i32
    %c0_i32_0 = arith.constant 0 : i32
    return %arg0, %c0_i32 : i32, i32
  }
}

</mosaic_0001>

<llo_original>
// kernel: tpu_custom_call.1
$region0: #{tpu_custom_call.1}
  #allocation0 [shape = 'u32[]', space=smem, size = 0x4, offset = 0x4, fixed_abs, tag = 'smem constant byte address 0x4 - core index']
  #allocation1 [shape = 'u32[72,128]{1,0:T(1,128)}', space=vmem, size = 0x9000, scoped, tag = 'internal scratch']
  %s0 = inlined_call_operand.hbm [shape: f32[256,512], index: 0, kind: input, shape index: {}]
  %s1 = inlined_call_operand.hbm [shape: bf16[512,256], index: 1, kind: input, shape index: {}]
  %s2 = inlined_call_operand.hbm [shape: f32[256,256], index: 2, kind: output, shape index: {}]
  %s3 = sld [smem:[#allocation0]]
  $region26: #{tpu_custom_call.1} parent=0
    _
  %s5 = ssub.s32 1, %s3
  %s6 = scalar_select 0, %s5, %s3
  $region1: #{tpu_custom_call.1} parent=0
    #allocation2 [shape = 'u8[524288]{0}', space=vmem, size = 0x80000, scoped, tag = 'input window, operand 0, single buffered']
    #allocation3 [shape = 's32[1]{0}', space=sflag, size = 0x4, scoped, tag = 'scoped memory for tpu_custom_call.1']
    #allocation4 [shape = 's32[1]{0}', space=sflag, size = 0x4, scoped, tag = 'scoped memory for tpu_custom_call.1']
    #allocation5 [shape = 'u8[262144]{0}', space=vmem, size = 0x40000, scoped, tag = 'input window, operand 1, single buffered']
    #allocation6 [shape = 's32[1]{0}', space=sflag, size = 0x4, scoped, tag = 'scoped memory for tpu_custom_call.1']
    #allocation7 [shape = 'u8[262144]{0}', space=vmem, size = 0x40000, scoped, tag = 'output window, operand 0, single buffered']
    %7 = vsyncpa [#allocation3], 0
    %8 = vsyncpa [#allocation6], 0
    %9 = vsyncpa [#allocation4], 0
    // Predicated region
    $region2: #{tpu_custom_call.1} parent=1 // pred_check
      _
    $region3: #{tpu_custom_call.1} parent=1 // pred_check_branch
      %11 = sbr.rel (0) target = $region5
    $region4: #{tpu_custom_call.1} parent=1 // pred_region
      %13 = vsyncadd [#allocation3], 0
      %s14 = sshll.u32 %s0, 4
      %s15 = int_to_ptr.hbm [resolvable:$true] %s14
      %s16 = sshll.u32 [#allocation2], 4
      %s17 = int_to_ptr.vmem [resolvable:$true] %s16
      %22 = dma.hbm_to_vmem [thread:$0]  %s15, 16384, %s17, [#allocation3], 512, 512, 32
    $region5: #{tpu_custom_call.1} parent=1 // pred_fallthru
      _
    // Predicated region
    $region6: #{tpu_custom_call.1} parent=1 // pred_check
      _
    $region7: #{tpu_custom_call.1} parent=1 // pred_check_branch
      %24 = sbr.rel (0) target = $region9
    $region8: #{tpu_custom_call.1} parent=1 // pred_region
      %26 = vsyncadd [#allocation6], 0
      %s27 = sshll.u32 %s1, 4
      %s28 = int_to_ptr.hbm [resolvable:$true] %s27
      %s29 = sshll.u32 [#allocation5], 4
      %s30 = int_to_ptr.vmem [resolvable:$true] %s29
      %35 = dma.hbm_to_vmem [thread:$0]  %s28, 8192, %s30, [#allocation6], 128, 128, 8
    $region9: #{tpu_custom_call.1} parent=1 // pred_fallthru
      _
    // Predicated region
    $region10: #{tpu_custom_call.1} parent=1 // pred_check
      _
    $region11: #{tpu_custom_call.1} parent=1 // pred_check_branch
      %37 = sbr.rel (0) target = $region13
    $region12: #{tpu_custom_call.1} parent=1 // pred_region
      %39 = dma.done [#allocation3], 16384
    $region13: #{tpu_custom_call.1} parent=1 // pred_fallthru
      _
    // Predicated region
    $region14: #{tpu_custom_call.1} parent=1 // pred_check
      _
    $region15: #{tpu_custom_call.1} parent=1 // pred_check_branch
      %41 = sbr.rel (0) target = $region17
    $region16: #{tpu_custom_call.1} parent=1 // pred_region
      %43 = dma.done [#allocation6], 8192
    $region17: #{tpu_custom_call.1} parent=1 // pred_fallthru
      _
    %v44 = vld [vmem:[#allocation2] sm:$0xff]
    %v45 = vld [vmem:[#allocation2 + $0x8] sm:$0xff]
    %v46 = vld [vmem:[#allocation2 + $0x10] sm:$0xff]
    %v47 = vld [vmem:[#allocation2 + $0x18] sm:$0xff]
    %v48 = vld [vmem:[#allocation2 + $0x20] sm:$0xff]
    %v49 = vld [vmem:[#allocation2 + $0x28] sm:$0xff]
    %v50 = vld [vmem:[#allocation2 + $0x30] sm:$0xff]
    %v51 = vld [vmem:[#allocation2 + $0x38] sm:$0xff]
    %v52 = vld [vmem:[#allocation2 + $0x40] sm:$0xff]
    %v53 = vld [vmem:[#allocation2 + $0x48] sm:$0xff]
    %v54 = vld [vmem:[#allocation2 + $0x50] sm:$0xff]
    %v55 = vld [vmem:[#allocation2 + $0x58] sm:$0xff]
    %v56 = vld [vmem:[#allocation2 + $0x60] sm:$0xff]
    %v57 = vld [vmem:[#allocation2 + $0x68] sm:$0xff]
    %v58 = vld [vmem:[#allocation2 + $0x70] sm:$0xff]
    %v59 = vld [vmem:[#allocation2 + $0x78] sm:$0xff]
    %v60 = vld [vmem:[#allocation2 + $0x80] sm:$0xff]
    %v61 = vld [vmem:[#allocation2 + $0x88] sm:$0xff]
    %v62 = vld [vmem:[#allocation2 + $0x90] sm:$0xff]
    %v63 = vld [vmem:[#allocation2 + $0x98] sm:$0xff]
    %v64 = vld [vmem:[#allocation2 + $0xa0] sm:$0xff]
    %v65 = vld [vmem:[#allocation2 + $0xa8] sm:$0xff]
    %v66 = vld [vmem:[#allocation2 + $0xb0] sm:$0xff]
    %v67 = vld [vmem:[#allocation2 + $0xb8] sm:$0xff]
    %v68 = vld [vmem:[#allocation2 + $0xc0] sm:$0xff]
    %v69 = vld [vmem:[#allocation2 + $0xc8] sm:$0xff]
    %v70 = vld [vmem:[#allocation2 + $0xd0] sm:$0xff]
    %v71 = vld [vmem:[#allocation2 + $0xd8] sm:$0xff]
    %v72 = vld [vmem:[#allocation2 + $0xe0] sm:$0xff]
    %v73 = vld [vmem:[#allocation2 + $0xe8] sm:$0xff]
    %v74 = vld [vmem:[#allocation2 + $0xf0] sm:$0xff]
    %v75 = vld [vmem:[#allocation2 + $0xf8] sm:$0xff]
    %v76 = vld [vmem:[#allocation2 + $0x100] sm:$0xff]
    %v77 = vld [vmem:[#allocation2 + $0x108] sm:$0xff]
    %v78 = vld [vmem:[#allocation2 + $0x110] sm:$0xff]
    %v79 = vld [vmem:[#allocation2 + $0x118] sm:$0xff]
    %v80 = vld [vmem:[#allocation2 + $0x120] sm:$0xff]
    %v81 = vld [vmem:[#allocation2 + $0x128] sm:$0xff]
    %v82 = vld [vmem:[#allocation2 + $0x130] sm:$0xff]
    %v83 = vld [vmem:[#allocation2 + $0x138] sm:$0xff]
    %v84 = vld [vmem:[#allocation2 + $0x140] sm:$0xff]
    %v85 = vld [vmem:[#allocation2 + $0x148] sm:$0xff]
    %v86 = vld [vmem:[#allocation2 + $0x150] sm:$0xff]
    %v87 = vld [vmem:[#allocation2 + $0x158] sm:$0xff]
    %v88 = vld [vmem:[#allocation2 + $0x160] sm:$0xff]
    %v89 = vld [vmem:[#allocation2 + $0x168] sm:$0xff]
    %v90 = vld [vmem:[#allocation2 + $0x170] sm:$0xff]
    %v91 = vld [vmem:[#allocation2 + $0x178] sm:$0xff]
    %v92 = vld [vmem:[#allocation2 + $0x180] sm:$0xff]
    %v93 = vld [vmem:[#allocation2 + $0x188] sm:$0xff]
    %v94 = vld [vmem:[#allocation2 + $0x190] sm:$0xff]
    %v95 = vld [vmem:[#allocation2 + $0x198] sm:$0xff]
    %v96 = vld [vmem:[#allocation2 + $0x1a0] sm:$0xff]
    %v97 = vld [vmem:[#allocation2 + $0x1a8] sm:$0xff]
    %v98 = vld [vmem:[#allocation2 + $0x1b0] sm:$0xff]
    %v99 = vld [vmem:[#allocation2 + $0x1b8] sm:$0xff]
    %v100 = vld [vmem:[#allocation2 + $0x1c0] sm:$0xff]
    %v101 = vld [vmem:[#allocation2 + $0x1c8] sm:$0xff]
    %v102 = vld [vmem:[#allocation2 + $0x1d0] sm:$0xff]
    %v103 = vld [vmem:[#allocation2 + $0x1d8] sm:$0xff]
    %v104 = vld [vmem:[#allocation2 + $0x1e0] sm:$0xff]
    %v105 = vld [vmem:[#allocation2 + $0x1e8] sm:$0xff]
    %v106 = vld [vmem:[#allocation2 + $0x1f0] sm:$0xff]
    %v107 = vld [vmem:[#allocation2 + $0x1f8] sm:$0xff]
    %v108 = vld [vmem:[#allocation2 + $0x200] sm:$0xff]
    %v109 = vld [vmem:[#allocation2 + $0x208] sm:$0xff]
    %v110 = vld [vmem:[#allocation2 + $0x210] sm:$0xff]
    %v111 = vld [vmem:[#allocation2 + $0x218] sm:$0xff]
    %v112 = vld [vmem:[#allocation2 + $0x220] sm:$0xff]
    %v113 = vld [vmem:[#allocation2 + $0x228] sm:$0xff]
    %v114 = vld [vmem:[#allocation2 + $0x230] sm:$0xff]
    %v115 = vld [vmem:[#allocation2 + $0x238] sm:$0xff]
    %v116 = vld [vmem:[#allocation2 + $0x240] sm:$0xff]
    %v117 = vld [vmem:[#allocation2 + $0x248] sm:$0xff]
    %v118 = vld [vmem:[#allocation2 + $0x250] sm:$0xff]
    %v119 = vld [vmem:[#allocation2 + $0x258] sm:$0xff]
    %v120 = vld [vmem:[#allocation2 + $0x260] sm:$0xff]
    %v121 = vld [vmem:[#allocation2 + $0x268] sm:$0xff]
    %v122 = vld [vmem:[#allocation2 + $0x270] sm:$0xff]
    %v123 = vld [vmem:[#allocation2 + $0x278] sm:$0xff]
    %v124 = vld [vmem:[#allocation2 + $0x280] sm:$0xff]
    %v125 = vld [vmem:[#allocation2 + $0x288] sm:$0xff]
    %v126 = vld [vmem:[#allocation2 + $0x290] sm:$0xff]
    %v127 = vld [vmem:[#allocation2 + $0x298] sm:$0xff]
    %v128 = vld [vmem:[#allocation2 + $0x2a0] sm:$0xff]
    %v129 = vld [vmem:[#allocation2 + $0x2a8] sm:$0xff]
    %v130 = vld [vmem:[#allocation2 + $0x2b0] sm:$0xff]
    %v131 = vld [vmem:[#allocation2 + $0x2b8] sm:$0xff]
    %v132 = vld [vmem:[#allocation2 + $0x2c0] sm:$0xff]
    %v133 = vld [vmem:[#allocation2 + $0x2c8] sm:$0xff]
    %v134 = vld [vmem:[#allocation2 + $0x2d0] sm:$0xff]
    %v135 = vld [vmem:[#allocation2 + $0x2d8] sm:$0xff]
    %v136 = vld [vmem:[#allocation2 + $0x2e0] sm:$0xff]
    %v137 = vld [vmem:[#allocation2 + $0x2e8] sm:$0xff]
    %v138 = vld [vmem:[#allocation2 + $0x2f0] sm:$0xff]
    %v139 = vld [vmem:[#allocation2 + $0x2f8] sm:$0xff]
    %v140 = vld [vmem:[#allocation2 + $0x300] sm:$0xff]
    %v141 = vld [vmem:[#allocation2 + $0x308] sm:$0xff]
    %v142 = vld [vmem:[#allocation2 + $0x310] sm:$0xff]
    %v143 = vld [vmem:[#allocation2 + $0x318] sm:$0xff]
    %v144 = vld [vmem:[#allocation2 + $0x320] sm:$0xff]
    %v145 = vld [vmem:[#allocation2 + $0x328] sm:$0xff]
    %v146 = vld [vmem:[#allocation2 + $0x330] sm:$0xff]
    %v147 = vld [vmem:[#allocation2 + $0x338] sm:$0xff]
    %v148 = vld [vmem:[#allocation2 + $0x340] sm:$0xff]
    %v149 = vld [vmem:[#allocation2 + $0x348] sm:$0xff]
    %v150 = vld [vmem:[#allocation2 + $0x350] sm:$0xff]
    %v151 = vld [vmem:[#allocation2 + $0x358] sm:$0xff]
    %v152 = vld [vmem:[#allocation2 + $0x360] sm:$0xff]
    %v153 = vld [vmem:[#allocation2 + $0x368] sm:$0xff]
    %v154 = vld [vmem:[#allocation2 + $0x370] sm:$0xff]
    %v155 = vld [vmem:[#allocation2 + $0x378] sm:$0xff]
    %v156 = vld [vmem:[#allocation2 + $0x380] sm:$0xff]
    %v157 = vld [vmem:[#allocation2 + $0x388] sm:$0xff]
    %v158 = vld [vmem:[#allocation2 + $0x390] sm:$0xff]
    %v159 = vld [vmem:[#allocation2 + $0x398] sm:$0xff]
    %v160 = vld [vmem:[#allocation2 + $0x3a0] sm:$0xff]
    %v161 = vld [vmem:[#allocation2 + $0x3a8] sm:$0xff]
    %v162 = vld [vmem:[#allocation2 + $0x3b0] sm:$0xff]
    %v163 = vld [vmem:[#allocation2 + $0x3b8] sm:$0xff]
    %v164 = vld [vmem:[#allocation2 + $0x3c0] sm:$0xff]
    %v165 = vld [vmem:[#allocation2 + $0x3c8] sm:$0xff]
    %v166 = vld [vmem:[#allocation2 + $0x3d0] sm:$0xff]
    %v167 = vld [vmem:[#allocation2 + $0x3d8] sm:$0xff]
    %v168 = vld [vmem:[#allocation2 + $0x3e0] sm:$0xff]
    %v169 = vld [vmem:[#allocation2 + $0x3e8] sm:$0xff]
    %v170 = vld [vmem:[#allocation2 + $0x3f0] sm:$0xff]
    %v171 = vld [vmem:[#allocation2 + $0x3f8] sm:$0xff]
    %v172 = vpack.c.bf16 %v48, %v44
    %v173 = vpack.c.bf16 %v49, %v45
    %v174 = vpack.c.bf16 %v50, %v46
    %v175 = vpack.c.bf16 %v51, %v47
    %v176 = vpack.c.bf16 %v56, %v52
    %v177 = vpack.c.bf16 %v57, %v53
    %v178 = vpack.c.bf16 %v58, %v54
    %v179 = vpack.c.bf16 %v59, %v55
    %v180 = vpack.c.bf16 %v64, %v60
    %v181 = vpack.c.bf16 %v65, %v61
    %v182 = vpack.c.bf16 %v66, %v62
    %v183 = vpack.c.bf16 %v67, %v63
    %v184 = vpack.c.bf16 %v72, %v68
    %v185 = vpack.c.bf16 %v73, %v69
    %v186 = vpack.c.bf16 %v74, %v70
    %v187 = vpack.c.bf16 %v75, %v71
    %v188 = vpack.c.bf16 %v80, %v76
    %v189 = vpack.c.bf16 %v81, %v77
    %v190 = vpack.c.bf16 %v82, %v78
    %v191 = vpack.c.bf16 %v83, %v79
    %v192 = vpack.c.bf16 %v88, %v84
    %v193 = vpack.c.bf16 %v89, %v85
    %v194 = vpack.c.bf16 %v90, %v86
    %v195 = vpack.c.bf16 %v91, %v87
    %v196 = vpack.c.bf16 %v96, %v92
    %v197 = vpack.c.bf16 %v97, %v93
    %v198 = vpack.c.bf16 %v98, %v94
    %v199 = vpack.c.bf16 %v99, %v95
    %v200 = vpack.c.bf16 %v104, %v100
    %v201 = vpack.c.bf16 %v105, %v101
    %v202 = vpack.c.bf16 %v106, %v102
    %v203 = vpack.c.bf16 %v107, %v103
    %v204 = vpack.c.bf16 %v112, %v108
    %v205 = vpack.c.bf16 %v113, %v109
    %v206 = vpack.c.bf16 %v114, %v110
    %v207 = vpack.c.bf16 %v115, %v111
    %v208 = vpack.c.bf16 %v120, %v116
    %v209 = vpack.c.bf16 %v121, %v117
    %v210 = vpack.c.bf16 %v122, %v118
    %v211 = vpack.c.bf16 %v123, %v119
    %v212 = vpack.c.bf16 %v128, %v124
    %v213 = vpack.c.bf16 %v129, %v125
    %v214 = vpack.c.bf16 %v130, %v126
    %v215 = vpack.c.bf16 %v131, %v127
    %v216 = vpack.c.bf16 %v136, %v132
    %v217 = vpack.c.bf16 %v137, %v133
    %v218 = vpack.c.bf16 %v138, %v134
    %v219 = vpack.c.bf16 %v139, %v135
    %v220 = vpack.c.bf16 %v144, %v140
    %v221 = vpack.c.bf16 %v145, %v141
    %v222 = vpack.c.bf16 %v146, %v142
    %v223 = vpack.c.bf16 %v147, %v143
    %v224 = vpack.c.bf16 %v152, %v148
    %v225 = vpack.c.bf16 %v153, %v149
    %v226 = vpack.c.bf16 %v154, %v150
    %v227 = vpack.c.bf16 %v155, %v151
    %v228 = vpack.c.bf16 %v160, %v156
    %v229 = vpack.c.bf16 %v161, %v157
    %v230 = vpack.c.bf16 %v162, %v158
    %v231 = vpack.c.bf16 %v163, %v159
    %v232 = vpack.c.bf16 %v168, %v164
    %v233 = vpack.c.bf16 %v169, %v165
    %v234 = vpack.c.bf16 %v170, %v166
    %v235 = vpack.c.bf16 %v171, %v167
    %v236 = vld [vmem:[#allocation5] sm:$0xff]
    %v237 = vld [vmem:[#allocation5 + $0x8] sm:$0xff]
    %v238 = vld [vmem:[#allocation5 + $0x10] sm:$0xff]
    %v239 = vld [vmem:[#allocation5 + $0x18] sm:$0xff]
    %v240 = vld [vmem:[#allocation5 + $0x20] sm:$0xff]
    %v241 = vld [vmem:[#allocation5 + $0x28] sm:$0xff]
    %v242 = vld [vmem:[#allocation5 + $0x30] sm:$0xff]
    %v243 = vld [vmem:[#allocation5 + $0x38] sm:$0xff]
    %v244 = vld [vmem:[#allocation5 + $0x40] sm:$0xff]
    %v245 = vld [vmem:[#allocation5 + $0x48] sm:$0xff]
    %v246 = vld [vmem:[#allocation5 + $0x50] sm:$0xff]
    %v247 = vld [vmem:[#allocation5 + $0x58] sm:$0xff]
    %v248 = vld [vmem:[#allocation5 + $0x60] sm:$0xff]
    %v249 = vld [vmem:[#allocation5 + $0x68] sm:$0xff]
    %v250 = vld [vmem:[#allocation5 + $0x70] sm:$0xff]
    %v251 = vld [vmem:[#allocation5 + $0x78] sm:$0xff]
    %v252 = vld [vmem:[#allocation5 + $0x80] sm:$0xff]
    %v253 = vld [vmem:[#allocation5 + $0x88] sm:$0xff]
    %v254 = vld [vmem:[#allocation5 + $0x90] sm:$0xff]
    %v255 = vld [vmem:[#allocation5 + $0x98] sm:$0xff]
    %v256 = vld [vmem:[#allocation5 + $0xa0] sm:$0xff]
    %v257 = vld [vmem:[#allocation5 + $0xa8] sm:$0xff]
    %v258 = vld [vmem:[#allocation5 + $0xb0] sm:$0xff]
    %v259 = vld [vmem:[#allocation5 + $0xb8] sm:$0xff]
    %v260 = vld [vmem:[#allocation5 + $0xc0] sm:$0xff]
    %v261 = vld [vmem:[#allocation5 + $0xc8] sm:$0xff]
    %v262 = vld [vmem:[#allocation5 + $0xd0] sm:$0xff]
    %v263 = vld [vmem:[#allocation5 + $0xd8] sm:$0xff]
    %v264 = vld [vmem:[#allocation5 + $0xe0] sm:$0xff]
    %v265 = vld [vmem:[#allocation5 + $0xe8] sm:$0xff]
    %v266 = vld [vmem:[#allocation5 + $0xf0] sm:$0xff]
    %v267 = vld [vmem:[#allocation5 + $0xf8] sm:$0xff]
    %v268 = vld [vmem:[#allocation5 + $0x100] sm:$0xff]
    %v269 = vld [vmem:[#allocation5 + $0x108] sm:$0xff]
    %v270 = vld [vmem:[#allocation5 + $0x110] sm:$0xff]
    %v271 = vld [vmem:[#allocation5 + $0x118] sm:$0xff]
    %v272 = vld [vmem:[#allocation5 + $0x120] sm:$0xff]
    %v273 = vld [vmem:[#allocation5 + $0x128] sm:$0xff]
    %v274 = vld [vmem:[#allocation5 + $0x130] sm:$0xff]
    %v275 = vld [vmem:[#allocation5 + $0x138] sm:$0xff]
    %v276 = vld [vmem:[#allocation5 + $0x140] sm:$0xff]
    %v277 = vld [vmem:[#allocation5 + $0x148] sm:$0xff]
    %v278 = vld [vmem:[#allocation5 + $0x150] sm:$0xff]
    %v279 = vld [vmem:[#allocation5 + $0x158] sm:$0xff]
    %v280 = vld [vmem:[#allocation5 + $0x160] sm:$0xff]
    %v281 = vld [vmem:[#allocation5 + $0x168] sm:$0xff]
    %v282 = vld [vmem:[#allocation5 + $0x170] sm:$0xff]
    %v283 = vld [vmem:[#allocation5 + $0x178] sm:$0xff]
    %v284 = vld [vmem:[#allocation5 + $0x180] sm:$0xff]
    %v285 = vld [vmem:[#allocation5 + $0x188] sm:$0xff]
    %v286 = vld [vmem:[#allocation5 + $0x190] sm:$0xff]
    %v287 = vld [vmem:[#allocation5 + $0x198] sm:$0xff]
    %v288 = vld [vmem:[#allocation5 + $0x1a0] sm:$0xff]
    %v289 = vld [vmem:[#allocation5 + $0x1a8] sm:$0xff]
    %v290 = vld [vmem:[#allocation5 + $0x1b0] sm:$0xff]
    %v291 = vld [vmem:[#allocation5 + $0x1b8] sm:$0xff]
    %v292 = vld [vmem:[#allocation5 + $0x1c0] sm:$0xff]
    %v293 = vld [vmem:[#allocation5 + $0x1c8] sm:$0xff]
    %v294 = vld [vmem:[#allocation5 + $0x1d0] sm:$0xff]
    %v295 = vld [vmem:[#allocation5 + $0x1d8] sm:$0xff]
    %v296 = vld [vmem:[#allocation5 + $0x1e0] sm:$0xff]
    %v297 = vld [vmem:[#allocation5 + $0x1e8] sm:$0xff]
    %v298 = vld [vmem:[#allocation5 + $0x1f0] sm:$0xff]
    %v299 = vld [vmem:[#allocation5 + $0x1f8] sm:$0xff]
    %v364 = vunpack.c.l.b16 %v236
    %v365 = vunpack.c.h.b16 %v236
    %v366 = vunpack.c.l.b16 %v237
    %v367 = vunpack.c.h.b16 %v237
    %v368 = vunpack.c.l.b16 %v238
    %v369 = vunpack.c.h.b16 %v238
    %v370 = vunpack.c.l.b16 %v239
    %v371 = vunpack.c.h.b16 %v239
    %v372 = vunpack.c.l.b16 %v240
    %v373 = vunpack.c.h.b16 %v240
    %v374 = vunpack.c.l.b16 %v241
    %v375 = vunpack.c.h.b16 %v241
    %v376 = vunpack.c.l.b16 %v242
    %v377 = vunpack.c.h.b16 %v242
    %v378 = vunpack.c.l.b16 %v243
    %v379 = vunpack.c.h.b16 %v243
    %v380 = vunpack.c.l.b16 %v244
    %v381 = vunpack.c.h.b16 %v244
    %v382 = vunpack.c.l.b16 %v245
    %v383 = vunpack.c.h.b16 %v245
    %v384 = vunpack.c.l.b16 %v246
    %v385 = vunpack.c.h.b16 %v246
    %v386 = vunpack.c.l.b16 %v247
    %v387 = vunpack.c.h.b16 %v247
    %v388 = vunpack.c.l.b16 %v248
    %v389 = vunpack.c.h.b16 %v248
    %v390 = vunpack.c.l.b16 %v249
    %v391 = vunpack.c.h.b16 %v249
    %v392 = vunpack.c.l.b16 %v250
    %v393 = vunpack.c.h.b16 %v250
    %v394 = vunpack.c.l.b16 %v251
    %v395 = vunpack.c.h.b16 %v251
    %v396 = vunpack.c.l.b16 %v252
    %v397 = vunpack.c.h.b16 %v252
    %v398 = vunpack.c.l.b16 %v253
    %v399 = vunpack.c.h.b16 %v253
    %v400 = vunpack.c.l.b16 %v254
    %v401 = vunpack.c.h.b16 %v254
    %v402 = vunpack.c.l.b16 %v255
    %v403 = vunpack.c.h.b16 %v255
    %v404 = vunpack.c.l.b16 %v256
    %v405 = vunpack.c.h.b16 %v256
    %v406 = vunpack.c.l.b16 %v257
    %v407 = vunpack.c.h.b16 %v257
    %v408 = vunpack.c.l.b16 %v258
    %v409 = vunpack.c.h.b16 %v258
    %v410 = vunpack.c.l.b16 %v259
    %v411 = vunpack.c.h.b16 %v259
    %v412 = vunpack.c.l.b16 %v260
    %v413 = vunpack.c.h.b16 %v260
    %v414 = vunpack.c.l.b16 %v261
    %v415 = vunpack.c.h.b16 %v261
    %v416 = vunpack.c.l.b16 %v262
    %v417 = vunpack.c.h.b16 %v262
    %v418 = vunpack.c.l.b16 %v263
    %v419 = vunpack.c.h.b16 %v263
    %v420 = vunpack.c.l.b16 %v264
    %v421 = vunpack.c.h.b16 %v264
    %v422 = vunpack.c.l.b16 %v265
    %v423 = vunpack.c.h.b16 %v265
    %v424 = vunpack.c.l.b16 %v266
    %v425 = vunpack.c.h.b16 %v266
    %v426 = vunpack.c.l.b16 %v267
    %v427 = vunpack.c.h.b16 %v267
    %v428 = vunpack.c.l.b16 %v268
    %v429 = vunpack.c.h.b16 %v268
    %v430 = vunpack.c.l.b16 %v269
    %v431 = vunpack.c.h.b16 %v269
    %v432 = vunpack.c.l.b16 %v270
    %v433 = vunpack.c.h.b16 %v270
    %v434 = vunpack.c.l.b16 %v271
    %v435 = vunpack.c.h.b16 %v271
    %v436 = vunpack.c.l.b16 %v272
    %v437 = vunpack.c.h.b16 %v272
    %v438 = vunpack.c.l.b16 %v273
    %v439 = vunpack.c.h.b16 %v273
    %v440 = vunpack.c.l.b16 %v274
    %v441 = vunpack.c.h.b16 %v274
    %v442 = vunpack.c.l.b16 %v275
    %v443 = vunpack.c.h.b16 %v275
    %v444 = vunpack.c.l.b16 %v276
    %v445 = vunpack.c.h.b16 %v276
    %v446 = vunpack.c.l.b16 %v277
    %v447 = vunpack.c.h.b16 %v277
    %v448 = vunpack.c.l.b16 %v278
    %v449 = vunpack.c.h.b16 %v278
    %v450 = vunpack.c.l.b16 %v279
    %v451 = vunpack.c.h.b16 %v279
    %v452 = vunpack.c.l.b16 %v280
    %v453 = vunpack.c.h.b16 %v280
    %v454 = vunpack.c.l.b16 %v281
    %v455 = vunpack.c.h.b16 %v281
    %v456 = vunpack.c.l.b16 %v282
    %v457 = vunpack.c.h.b16 %v282
    %v458 = vunpack.c.l.b16 %v283
    %v459 = vunpack.c.h.b16 %v283
    %v460 = vunpack.c.l.b16 %v284
    %v461 = vunpack.c.h.b16 %v284
    %v462 = vunpack.c.l.b16 %v285
    %v463 = vunpack.c.h.b16 %v285
    %v464 = vunpack.c.l.b16 %v286
    %v465 = vunpack.c.h.b16 %v286
    %v466 = vunpack.c.l.b16 %v287
    %v467 = vunpack.c.h.b16 %v287
    %v468 = vunpack.c.l.b16 %v288
    %v469 = vunpack.c.h.b16 %v288
    %v470 = vunpack.c.l.b16 %v289
    %v471 = vunpack.c.h.b16 %v289
    %v472 = vunpack.c.l.b16 %v290
    %v473 = vunpack.c.h.b16 %v290
    %v474 = vunpack.c.l.b16 %v291
    %v475 = vunpack.c.h.b16 %v291
    %v476 = vunpack.c.l.b16 %v292
    %v477 = vunpack.c.h.b16 %v292
    %v478 = vunpack.c.l.b16 %v293
    %v479 = vunpack.c.h.b16 %v293
    %v480 = vunpack.c.l.b16 %v294
    %v481 = vunpack.c.h.b16 %v294
    %v482 = vunpack.c.l.b16 %v295
    %v483 = vunpack.c.h.b16 %v295
    %v484 = vunpack.c.l.b16 %v296
    %v485 = vunpack.c.h.b16 %v296
    %v486 = vunpack.c.l.b16 %v297
    %v487 = vunpack.c.h.b16 %v297
    %v488 = vunpack.c.l.b16 %v298
    %v489 = vunpack.c.h.b16 %v298
    %v490 = vunpack.c.l.b16 %v299
    %v491 = vunpack.c.h.b16 %v299
    %v492 = vpack.c.b16 %v366, %v364
    %v493 = vpack.c.b16 %v367, %v365
    %v494 = vpack.c.b16 %v370, %v368
    %v495 = vpack.c.b16 %v371, %v369
    %v496 = vpack.c.b16 %v374, %v372
    %v497 = vpack.c.b16 %v375, %v373
    %v498 = vpack.c.b16 %v378, %v376
    %v499 = vpack.c.b16 %v379, %v377
    %v500 = vpack.c.b16 %v382, %v380
    %v501 = vpack.c.b16 %v383, %v381
    %v502 = vpack.c.b16 %v386, %v384
    %v503 = vpack.c.b16 %v387, %v385
    %v504 = vpack.c.b16 %v390, %v388
    %v505 = vpack.c.b16 %v391, %v389
    %v506 = vpack.c.b16 %v394, %v392
    %v507 = vpack.c.b16 %v395, %v393
    %v508 = vpack.c.b16 %v398, %v396
    %v509 = vpack.c.b16 %v399, %v397
    %v510 = vpack.c.b16 %v402, %v400
    %v511 = vpack.c.b16 %v403, %v401
    %v512 = vpack.c.b16 %v406, %v404
    %v513 = vpack.c.b16 %v407, %v405
    %v514 = vpack.c.b16 %v410, %v408
    %v515 = vpack.c.b16 %v411, %v409
    %v516 = vpack.c.b16 %v414, %v412
    %v517 = vpack.c.b16 %v415, %v413
    %v518 = vpack.c.b16 %v418, %v416
    %v519 = vpack.c.b16 %v419, %v417
    %v520 = vpack.c.b16 %v422, %v420
    %v521 = vpack.c.b16 %v423, %v421
    %v522 = vpack.c.b16 %v426, %v424
    %v523 = vpack.c.b16 %v427, %v425
    %v524 = vpack.c.b16 %v430, %v428
    %v525 = vpack.c.b16 %v431, %v429
    %v526 = vpack.c.b16 %v434, %v432
    %v527 = vpack.c.b16 %v435, %v433
    %v528 = vpack.c.b16 %v438, %v436
    %v529 = vpack.c.b16 %v439, %v437
    %v530 = vpack.c.b16 %v442, %v440
    %v531 = vpack.c.b16 %v443, %v441
    %v532 = vpack.c.b16 %v446, %v444
    %v533 = vpack.c.b16 %v447, %v445
    %v534 = vpack.c.b16 %v450, %v448
    %v535 = vpack.c.b16 %v451, %v449
    %v536 = vpack.c.b16 %v454, %v452
    %v537 = vpack.c.b16 %v455, %v453
    %v538 = vpack.c.b16 %v458, %v456
    %v539 = vpack.c.b16 %v459, %v457
    %v540 = vpack.c.b16 %v462, %v460
    %v541 = vpack.c.b16 %v463, %v461
    %v542 = vpack.c.b16 %v466, %v464
    %v543 = vpack.c.b16 %v467, %v465
    %v544 = vpack.c.b16 %v470, %v468
    %v545 = vpack.c.b16 %v471, %v469
    %v546 = vpack.c.b16 %v474, %v472
    %v547 = vpack.c.b16 %v475, %v473
    %v548 = vpack.c.b16 %v478, %v476
    %v549 = vpack.c.b16 %v479, %v477
    %v550 = vpack.c.b16 %v482, %v480
    %v551 = vpack.c.b16 %v483, %v481
    %v552 = vpack.c.b16 %v486, %v484
    %v553 = vpack.c.b16 %v487, %v485
    %v554 = vpack.c.b16 %v490, %v488
    %v555 = vpack.c.b16 %v491, %v489
    %620 = vmatpush.bf16.msra.mxu0 %v506
    %621 = vmatpush.bf16.msra.mxu0 %v504
    %622 = vmatpush.bf16.msra.mxu0 %v502
    %623 = vmatpush.bf16.msra.mxu0 %v500
    %624 = vmatpush.bf16.msra.mxu0 %v498
    %625 = vmatpush.bf16.msra.mxu0 %v496
    %626 = vmatpush.bf16.msra.mxu0 %v494
    %627 = vmatpush.bf16.msra.mxu0 %v492
    %628 = vmatmul.bf16.gmra.mxu0 %v172
    %v629 = vpop.f32.mrf.mxu0
    %v630 = vadd.f32 0.0, %v629
    %v631 = vpop.f32.mrf.mxu0
    %v632 = vadd.f32 0.0, %v631
    %633 = vmatmul.bf16.gmra.mxu0 %v176
    %v634 = vpop.f32.mrf.mxu0
    %v635 = vadd.f32 0.0, %v634
    %v636 = vpop.f32.mrf.mxu0
    %v637 = vadd.f32 0.0, %v636
    %638 = vmatmul.bf16.gmra.mxu0 %v180
    %v639 = vpop.f32.mrf.mxu0
    %v640 = vadd.f32 0.0, %v639
    %v641 = vpop.f32.mrf.mxu0
    %v642 = vadd.f32 0.0, %v641
    %643 = vmatmul.bf16.gmra.mxu0 %v184
    %v644 = vpop.f32.mrf.mxu0
    %v645 = vadd.f32 0.0, %v644
    %v646 = vpop.f32.mrf.mxu0
    %v647 = vadd.f32 0.0, %v646
    %648 = vmatmul.bf16.gmra.mxu0 %v188
    %v649 = vpop.f32.mrf.mxu0
    %v650 = vadd.f32 0.0, %v649
    %v651 = vpop.f32.mrf.mxu0
    %v652 = vadd.f32 0.0, %v651
    %653 = vmatmul.bf16.gmra.mxu0 %v192
    %v654 = vpop.f32.mrf.mxu0
    %v655 = vadd.f32 0.0, %v654
    %v656 = vpop.f32.mrf.mxu0
    %v657 = vadd.f32 0.0, %v656
    %658 = vmatmul.bf16.gmra.mxu0 %v196
    %v659 = vpop.f32.mrf.mxu0
    %v660 = vadd.f32 0.0, %v659
    %v661 = vpop.f32.mrf.mxu0
    %v662 = vadd.f32 0.0, %v661
    %663 = vmatmul.bf16.gmra.mxu0 %v200
    %v664 = vpop.f32.mrf.mxu0
    %v665 = vadd.f32 0.0, %v664
    %v666 = vpop.f32.mrf.mxu0
    %v667 = vadd.f32 0.0, %v666
    %668 = vmatmul.bf16.gmra.mxu0 %v204
    %v669 = vpop.f32.mrf.mxu0
    %v670 = vadd.f32 0.0, %v669
    %v671 = vpop.f32.mrf.mxu0
    %v672 = vadd.f32 0.0, %v671
    %673 = vmatmul.bf16.gmra.mxu0 %v208
    %v674 = vpop.f32.mrf.mxu0
    %v675 = vadd.f32 0.0, %v674
    %v676 = vpop.f32.mrf.mxu0
    %v677 = vadd.f32 0.0, %v676
    %678 = vmatmul.bf16.gmra.mxu0 %v212
    %v679 = vpop.f32.mrf.mxu0
    %v680 = vadd.f32 0.0, %v679
    %v681 = vpop.f32.mrf.mxu0
    %v682 = vadd.f32 0.0, %v681
    %683 = vmatmul.bf16.gmra.mxu0 %v216
    %v684 = vpop.f32.mrf.mxu0
    %v685 = vadd.f32 0.0, %v684
    %v686 = vpop.f32.mrf.mxu0
    %v687 = vadd.f32 0.0, %v686
    %688 = vmatmul.bf16.gmra.mxu0 %v220
    %v689 = vpop.f32.mrf.mxu0
    %v690 = vadd.f32 0.0, %v689
    %v691 = vpop.f32.mrf.mxu0
    %v692 = vadd.f32 0.0, %v691
    %693 = vmatmul.bf16.gmra.mxu0 %v224
    %v694 = vpop.f32.mrf.mxu0
    %v695 = vadd.f32 0.0, %v694
    %v696 = vpop.f32.mrf.mxu0
    %v697 = vadd.f32 0.0, %v696
    %698 = vmatmul.bf16.gmra.mxu0 %v228
    %v699 = vpop.f32.mrf.mxu0
    %v700 = vadd.f32 0.0, %v699
    %v701 = vpop.f32.mrf.mxu0
    %v702 = vadd.f32 0.0, %v701
    %703 = vmatmul.bf16.gmra.mxu0 %v232
    %v704 = vpop.f32.mrf.mxu0
    %v705 = vadd.f32 0.0, %v704
    %v706 = vpop.f32.mrf.mxu0
    %v707 = vadd.f32 0.0, %v706
    %708 = vdwg.mxu0
    %709 = vmatpush.bf16.msra.mxu0 %v522
    %710 = vmatpush.bf16.msra.mxu0 %v520
    %711 = vmatpush.bf16.msra.mxu0 %v518
    %712 = vmatpush.bf16.msra.mxu0 %v516
    %713 = vmatpush.bf16.msra.mxu0 %v514
    %714 = vmatpush.bf16.msra.mxu0 %v512
    %715 = vmatpush.bf16.msra.mxu0 %v510
    %716 = vmatpush.bf16.msra.mxu0 %v508
    %717 = vmatmul.bf16.gmra.mxu0 %v173
    %v718 = vpop.f32.mrf.mxu0
    %v719 = vadd.f32 %v630, %v718
    %v720 = vpop.f32.mrf.mxu0
    %v721 = vadd.f32 %v632, %v720
    %722 = vmatmul.bf16.gmra.mxu0 %v177
    %v723 = vpop.f32.mrf.mxu0
    %v724 = vadd.f32 %v635, %v723
    %v725 = vpop.f32.mrf.mxu0
    %v726 = vadd.f32 %v637, %v725
    %727 = vmatmul.bf16.gmra.mxu0 %v181
    %v728 = vpop.f32.mrf.mxu0
    %v729 = vadd.f32 %v640, %v728
    %v730 = vpop.f32.mrf.mxu0
    %v731 = vadd.f32 %v642, %v730
    %732 = vmatmul.bf16.gmra.mxu0 %v185
    %v733 = vpop.f32.mrf.mxu0
    %v734 = vadd.f32 %v645, %v733
    %v735 = vpop.f32.mrf.mxu0
    %v736 = vadd.f32 %v647, %v735
    %737 = vmatmul.bf16.gmra.mxu0 %v189
    %v738 = vpop.f32.mrf.mxu0
    %v739 = vadd.f32 %v650, %v738
    %v740 = vpop.f32.mrf.mxu0
    %v741 = vadd.f32 %v652, %v740
    %742 = vmatmul.bf16.gmra.mxu0 %v193
    %v743 = vpop.f32.mrf.mxu0
    %v744 = vadd.f32 %v655, %v743
    %v745 = vpop.f32.mrf.mxu0
    %v746 = vadd.f32 %v657, %v745
    %747 = vmatmul.bf16.gmra.mxu0 %v197
    %v748 = vpop.f32.mrf.mxu0
    %v749 = vadd.f32 %v660, %v748
    %v750 = vpop.f32.mrf.mxu0
    %v751 = vadd.f32 %v662, %v750
    %752 = vmatmul.bf16.gmra.mxu0 %v201
    %v753 = vpop.f32.mrf.mxu0
    %v754 = vadd.f32 %v665, %v753
    %v755 = vpop.f32.mrf.mxu0
    %v756 = vadd.f32 %v667, %v755
    %757 = vmatmul.bf16.gmra.mxu0 %v205
    %v758 = vpop.f32.mrf.mxu0
    %v759 = vadd.f32 %v670, %v758
    %v760 = vpop.f32.mrf.mxu0
    %v761 = vadd.f32 %v672, %v760
    %762 = vmatmul.bf16.gmra.mxu0 %v209
    %v763 = vpop.f32.mrf.mxu0
    %v764 = vadd.f32 %v675, %v763
    %v765 = vpop.f32.mrf.mxu0
    %v766 = vadd.f32 %v677, %v765
    %767 = vmatmul.bf16.gmra.mxu0 %v213
    %v768 = vpop.f32.mrf.mxu0
    %v769 = vadd.f32 %v680, %v768
    %v770 = vpop.f32.mrf.mxu0
    %v771 = vadd.f32 %v682, %v770
    %772 = vmatmul.bf16.gmra.mxu0 %v217
    %v773 = vpop.f32.mrf.mxu0
    %v774 = vadd.f32 %v685, %v773
    %v775 = vpop.f32.mrf.mxu0
    %v776 = vadd.f32 %v687, %v775
    %777 = vmatmul.bf16.gmra.mxu0 %v221
    %v778 = vpop.f32.mrf.mxu0
    %v779 = vadd.f32 %v690, %v778
    %v780 = vpop.f32.mrf.mxu0
    %v781 = vadd.f32 %v692, %v780
    %782 = vmatmul.bf16.gmra.mxu0 %v225
    %v783 = vpop.f32.mrf.mxu0
    %v784 = vadd.f32 %v695, %v783
    %v785 = vpop.f32.mrf.mxu0
    %v786 = vadd.f32 %v697, %v785
    %787 = vmatmul.bf16.gmra.mxu0 %v229
    %v788 = vpop.f32.mrf.mxu0
    %v789 = vadd.f32 %v700, %v788
    %v790 = vpop.f32.mrf.mxu0
    %v791 = vadd.f32 %v702, %v790
    %792 = vmatmul.bf16.gmra.mxu0 %v233
    %v793 = vpop.f32.mrf.mxu0
    %v794 = vadd.f32 %v705, %v793
    %v795 = vpop.f32.mrf.mxu0
    %v796 = vadd.f32 %v707, %v795
    %797 = vdwg.mxu0
    %798 = vmatpush.bf16.msra.mxu0 %v538
    %799 = vmatpush.bf16.msra.mxu0 %v536
    %800 = vmatpush.bf16.msra.mxu0 %v534
    %801 = vmatpush.bf16.msra.mxu0 %v532
    %802 = vmatpush.bf16.msra.mxu0 %v530
    %803 = vmatpush.bf16.msra.mxu0 %v528
    %804 = vmatpush.bf16.msra.mxu0 %v526
    %805 = vmatpush.bf16.msra.mxu0 %v524
    %806 = vmatmul.bf16.gmra.mxu0 %v174
    %v807 = vpop.f32.mrf.mxu0
    %v808 = vadd.f32 %v719, %v807
    %v809 = vpop.f32.mrf.mxu0
    %v810 = vadd.f32 %v721, %v809
    %811 = vmatmul.bf16.gmra.mxu0 %v178
    %v812 = vpop.f32.mrf.mxu0
    %v813 = vadd.f32 %v724, %v812
    %v814 = vpop.f32.mrf.mxu0
    %v815 = vadd.f32 %v726, %v814
    %816 = vmatmul.bf16.gmra.mxu0 %v182
    %v817 = vpop.f32.mrf.mxu0
    %v818 = vadd.f32 %v729, %v817
    %v819 = vpop.f32.mrf.mxu0
    %v820 = vadd.f32 %v731, %v819
    %821 = vmatmul.bf16.gmra.mxu0 %v186
    %v822 = vpop.f32.mrf.mxu0
    %v823 = vadd.f32 %v734, %v822
    %v824 = vpop.f32.mrf.mxu0
    %v825 = vadd.f32 %v736, %v824
    %826 = vmatmul.bf16.gmra.mxu0 %v190
    %v827 = vpop.f32.mrf.mxu0
    %v828 = vadd.f32 %v739, %v827
    %v829 = vpop.f32.mrf.mxu0
    %v830 = vadd.f32 %v741, %v829
    %831 = vmatmul.bf16.gmra.mxu0 %v194
    %v832 = vpop.f32.mrf.mxu0
    %v833 = vadd.f32 %v744, %v832
    %v834 = vpop.f32.mrf.mxu0
    %v835 = vadd.f32 %v746, %v834
    %836 = vmatmul.bf16.gmra.mxu0 %v198
    %v837 = vpop.f32.mrf.mxu0
    %v838 = vadd.f32 %v749, %v837
    %v839 = vpop.f32.mrf.mxu0
    %v840 = vadd.f32 %v751, %v839
    %841 = vmatmul.bf16.gmra.mxu0 %v202
    %v842 = vpop.f32.mrf.mxu0
    %v843 = vadd.f32 %v754, %v842
    %v844 = vpop.f32.mrf.mxu0
    %v845 = vadd.f32 %v756, %v844
    %846 = vmatmul.bf16.gmra.mxu0 %v206
    %v847 = vpop.f32.mrf.mxu0
    %v848 = vadd.f32 %v759, %v847
    %v849 = vpop.f32.mrf.mxu0
    %v850 = vadd.f32 %v761, %v849
    %851 = vmatmul.bf16.gmra.mxu0 %v210
    %v852 = vpop.f32.mrf.mxu0
    %v853 = vadd.f32 %v764, %v852
    %v854 = vpop.f32.mrf.mxu0
    %v855 = vadd.f32 %v766, %v854
    %856 = vmatmul.bf16.gmra.mxu0 %v214
    %v857 = vpop.f32.mrf.mxu0
    %v858 = vadd.f32 %v769, %v857
    %v859 = vpop.f32.mrf.mxu0
    %v860 = vadd.f32 %v771, %v859
    %861 = vmatmul.bf16.gmra.mxu0 %v218
    %v862 = vpop.f32.mrf.mxu0
    %v863 = vadd.f32 %v774, %v862
    %v864 = vpop.f32.mrf.mxu0
    %v865 = vadd.f32 %v776, %v864
    %866 = vmatmul.bf16.gmra.mxu0 %v222
    %v867 = vpop.f32.mrf.mxu0
    %v868 = vadd.f32 %v779, %v867
    %v869 = vpop.f32.mrf.mxu0
    %v870 = vadd.f32 %v781, %v869
    %871 = vmatmul.bf16.gmra.mxu0 %v226
    %v872 = vpop.f32.mrf.mxu0
    %v873 = vadd.f32 %v784, %v872
    %v874 = vpop.f32.mrf.mxu0
    %v875 = vadd.f32 %v786, %v874
    %876 = vmatmul.bf16.gmra.mxu0 %v230
    %v877 = vpop.f32.mrf.mxu0
    %v878 = vadd.f32 %v789, %v877
    %v879 = vpop.f32.mrf.mxu0
    %v880 = vadd.f32 %v791, %v879
    %881 = vmatmul.bf16.gmra.mxu0 %v234
    %v882 = vpop.f32.mrf.mxu0
    %v883 = vadd.f32 %v794, %v882
    %v884 = vpop.f32.mrf.mxu0
    %v885 = vadd.f32 %v796, %v884
    %886 = vdwg.mxu0
    %887 = vmatpush.bf16.msra.mxu0 %v554
    %888 = vmatpush.bf16.msra.mxu0 %v552
    %889 = vmatpush.bf16.msra.mxu0 %v550
    %890 = vmatpush.bf16.msra.mxu0 %v548
    %891 = vmatpush.bf16.msra.mxu0 %v546
    %892 = vmatpush.bf16.msra.mxu0 %v544
    %893 = vmatpush.bf16.msra.mxu0 %v542
    %894 = vmatpush.bf16.msra.mxu0 %v540
    %895 = vmatmul.bf16.gmra.mxu0 %v175
    %v896 = vpop.f32.mrf.mxu0
    %v897 = vadd.f32 %v808, %v896
    %v898 = vpop.f32.mrf.mxu0
    %v899 = vadd.f32 %v810, %v898
    %900 = vmatmul.bf16.gmra.mxu0 %v179
    %v901 = vpop.f32.mrf.mxu0
    %v902 = vadd.f32 %v813, %v901
    %v903 = vpop.f32.mrf.mxu0
    %v904 = vadd.f32 %v815, %v903
    %905 = vmatmul.bf16.gmra.mxu0 %v183
    %v906 = vpop.f32.mrf.mxu0
    %v907 = vadd.f32 %v818, %v906
    %v908 = vpop.f32.mrf.mxu0
    %v909 = vadd.f32 %v820, %v908
    %910 = vmatmul.bf16.gmra.mxu0 %v187
    %v911 = vpop.f32.mrf.mxu0
    %v912 = vadd.f32 %v823, %v911
    %v913 = vpop.f32.mrf.mxu0
    %v914 = vadd.f32 %v825, %v913
    %915 = vmatmul.bf16.gmra.mxu0 %v191
    %v916 = vpop.f32.mrf.mxu0
    %v917 = vadd.f32 %v828, %v916
    %v918 = vpop.f32.mrf.mxu0
    %v919 = vadd.f32 %v830, %v918
    %920 = vmatmul.bf16.gmra.mxu0 %v195
    %v921 = vpop.f32.mrf.mxu0
    %v922 = vadd.f32 %v833, %v921
    %v923 = vpop.f32.mrf.mxu0
    %v924 = vadd.f32 %v835, %v923
    %925 = vmatmul.bf16.gmra.mxu0 %v199
    %v926 = vpop.f32.mrf.mxu0
    %v927 = vadd.f32 %v838, %v926
    %v928 = vpop.f32.mrf.mxu0
    %v929 = vadd.f32 %v840, %v928
    %930 = vmatmul.bf16.gmra.mxu0 %v203
    %v931 = vpop.f32.mrf.mxu0
    %v932 = vadd.f32 %v843, %v931
    %v933 = vpop.f32.mrf.mxu0
    %v934 = vadd.f32 %v845, %v933
    %935 = vmatmul.bf16.gmra.mxu0 %v207
    %v936 = vpop.f32.mrf.mxu0
    %v937 = vadd.f32 %v848, %v936
    %v938 = vpop.f32.mrf.mxu0
    %v939 = vadd.f32 %v850, %v938
    %940 = vmatmul.bf16.gmra.mxu0 %v211
    %v941 = vpop.f32.mrf.mxu0
    %v942 = vadd.f32 %v853, %v941
    %v943 = vpop.f32.mrf.mxu0
    %v944 = vadd.f32 %v855, %v943
    %945 = vmatmul.bf16.gmra.mxu0 %v215
    %v946 = vpop.f32.mrf.mxu0
    %v947 = vadd.f32 %v858, %v946
    %v948 = vpop.f32.mrf.mxu0
    %v949 = vadd.f32 %v860, %v948
    %950 = vmatmul.bf16.gmra.mxu0 %v219
    %v951 = vpop.f32.mrf.mxu0
    %v952 = vadd.f32 %v863, %v951
    %v953 = vpop.f32.mrf.mxu0
    %v954 = vadd.f32 %v865, %v953
    %955 = vmatmul.bf16.gmra.mxu0 %v223
    %v956 = vpop.f32.mrf.mxu0
    %v957 = vadd.f32 %v868, %v956
    %v958 = vpop.f32.mrf.mxu0
    %v959 = vadd.f32 %v870, %v958
    %960 = vmatmul.bf16.gmra.mxu0 %v227
    %v961 = vpop.f32.mrf.mxu0
    %v962 = vadd.f32 %v873, %v961
    %v963 = vpop.f32.mrf.mxu0
    %v964 = vadd.f32 %v875, %v963
    %965 = vmatmul.bf16.gmra.mxu0 %v231
    %v966 = vpop.f32.mrf.mxu0
    %v967 = vadd.f32 %v878, %v966
    %v968 = vpop.f32.mrf.mxu0
    %v969 = vadd.f32 %v880, %v968
    %970 = vmatmul.bf16.gmra.mxu0 %v235
    %v971 = vpop.f32.mrf.mxu0
    %v972 = vadd.f32 %v883, %v971
    %v973 = vpop.f32.mrf.mxu0
    %v974 = vadd.f32 %v885, %v973
    %975 = vdwg.mxu0
    %976 = vmatpush.bf16.msra.mxu0 %v507
    %977 = vmatpush.bf16.msra.mxu0 %v505
    %978 = vmatpush.bf16.msra.mxu0 %v503
    %979 = vmatpush.bf16.msra.mxu0 %v501
    %980 = vmatpush.bf16.msra.mxu0 %v499
    %981 = vmatpush.bf16.msra.mxu0 %v497
    %982 = vmatpush.bf16.msra.mxu0 %v495
    %983 = vmatpush.bf16.msra.mxu0 %v493
    %984 = vmatmul.bf16.gmra.mxu0 %v172
    %v985 = vpop.f32.mrf.mxu0
    %v986 = vadd.f32 0.0, %v985
    %v987 = vpop.f32.mrf.mxu0
    %v988 = vadd.f32 0.0, %v987
    %989 = vmatmul.bf16.gmra.mxu0 %v176
    %v990 = vpop.f32.mrf.mxu0
    %v991 = vadd.f32 0.0, %v990
    %v992 = vpop.f32.mrf.mxu0
    %v993 = vadd.f32 0.0, %v992
    %994 = vmatmul.bf16.gmra.mxu0 %v180
    %v995 = vpop.f32.mrf.mxu0
    %v996 = vadd.f32 0.0, %v995
    %v997 = vpop.f32.mrf.mxu0
    %v998 = vadd.f32 0.0, %v997
    %999 = vmatmul.bf16.gmra.mxu0 %v184
    %v1000 = vpop.f32.mrf.mxu0
    %v1001 = vadd.f32 0.0, %v1000
    %v1002 = vpop.f32.mrf.mxu0
    %v1003 = vadd.f32 0.0, %v1002
    %1004 = vmatmul.bf16.gmra.mxu0 %v188
    %v1005 = vpop.f32.mrf.mxu0
    %v1006 = vadd.f32 0.0, %v1005
    %v1007 = vpop.f32.mrf.mxu0
    %v1008 = vadd.f32 0.0, %v1007
    %1009 = vmatmul.bf16.gmra.mxu0 %v192
    %v1010 = vpop.f32.mrf.mxu0
    %v1011 = vadd.f32 0.0, %v1010
    %v1012 = vpop.f32.mrf.mxu0
    %v1013 = vadd.f32 0.0, %v1012
    %1014 = vmatmul.bf16.gmra.mxu0 %v196
    %v1015 = vpop.f32.mrf.mxu0
    %v1016 = vadd.f32 0.0, %v1015
    %v1017 = vpop.f32.mrf.mxu0
    %v1018 = vadd.f32 0.0, %v1017
    %1019 = vmatmul.bf16.gmra.mxu0 %v200
    %v1020 = vpop.f32.mrf.mxu0
    %v1021 = vadd.f32 0.0, %v1020
    %v1022 = vpop.f32.mrf.mxu0
    %v1023 = vadd.f32 0.0, %v1022
    %1024 = vmatmul.bf16.gmra.mxu0 %v204
    %v1025 = vpop.f32.mrf.mxu0
    %v1026 = vadd.f32 0.0, %v1025
    %v1027 = vpop.f32.mrf.mxu0
    %v1028 = vadd.f32 0.0, %v1027
    %1029 = vmatmul.bf16.gmra.mxu0 %v208
    %v1030 = vpop.f32.mrf.mxu0
    %v1031 = vadd.f32 0.0, %v1030
    %v1032 = vpop.f32.mrf.mxu0
    %v1033 = vadd.f32 0.0, %v1032
    %1034 = vmatmul.bf16.gmra.mxu0 %v212
    %v1035 = vpop.f32.mrf.mxu0
    %v1036 = vadd.f32 0.0, %v1035
    %v1037 = vpop.f32.mrf.mxu0
    %v1038 = vadd.f32 0.0, %v1037
    %1039 = vmatmul.bf16.gmra.mxu0 %v216
    %v1040 = vpop.f32.mrf.mxu0
    %v1041 = vadd.f32 0.0, %v1040
    %v1042 = vpop.f32.mrf.mxu0
    %v1043 = vadd.f32 0.0, %v1042
    %1044 = vmatmul.bf16.gmra.mxu0 %v220
    %v1045 = vpop.f32.mrf.mxu0
    %v1046 = vadd.f32 0.0, %v1045
    %v1047 = vpop.f32.mrf.mxu0
    %v1048 = vadd.f32 0.0, %v1047
    %1049 = vmatmul.bf16.gmra.mxu0 %v224
    %v1050 = vpop.f32.mrf.mxu0
    %v1051 = vadd.f32 0.0, %v1050
    %v1052 = vpop.f32.mrf.mxu0
    %v1053 = vadd.f32 0.0, %v1052
    %1054 = vmatmul.bf16.gmra.mxu0 %v228
    %v1055 = vpop.f32.mrf.mxu0
    %v1056 = vadd.f32 0.0, %v1055
    %v1057 = vpop.f32.mrf.mxu0
    %v1058 = vadd.f32 0.0, %v1057
    %1059 = vmatmul.bf16.gmra.mxu0 %v232
    %v1060 = vpop.f32.mrf.mxu0
    %v1061 = vadd.f32 0.0, %v1060
    %v1062 = vpop.f32.mrf.mxu0
    %v1063 = vadd.f32 0.0, %v1062
    %1064 = vdwg.mxu0
    %1065 = vmatpush.bf16.msra.mxu0 %v523
    %1066 = vmatpush.bf16.msra.mxu0 %v521
    %1067 = vmatpush.bf16.msra.mxu0 %v519
    %1068 = vmatpush.bf16.msra.mxu0 %v517
    %1069 = vmatpush.bf16.msra.mxu0 %v515
    %1070 = vmatpush.bf16.msra.mxu0 %v513
    %1071 = vmatpush.bf16.msra.mxu0 %v511
    %1072 = vmatpush.bf16.msra.mxu0 %v509
    %1073 = vmatmul.bf16.gmra.mxu0 %v173
    %v1074 = vpop.f32.mrf.mxu0
    %v1075 = vadd.f32 %v986, %v1074
    %v1076 = vpop.f32.mrf.mxu0
    %v1077 = vadd.f32 %v988, %v1076
    %1078 = vmatmul.bf16.gmra.mxu0 %v177
    %v1079 = vpop.f32.mrf.mxu0
    %v1080 = vadd.f32 %v991, %v1079
    %v1081 = vpop.f32.mrf.mxu0
    %v1082 = vadd.f32 %v993, %v1081
    %1083 = vmatmul.bf16.gmra.mxu0 %v181
    %v1084 = vpop.f32.mrf.mxu0
    %v1085 = vadd.f32 %v996, %v1084
    %v1086 = vpop.f32.mrf.mxu0
    %v1087 = vadd.f32 %v998, %v1086
    %1088 = vmatmul.bf16.gmra.mxu0 %v185
    %v1089 = vpop.f32.mrf.mxu0
    %v1090 = vadd.f32 %v1001, %v1089
    %v1091 = vpop.f32.mrf.mxu0
    %v1092 = vadd.f32 %v1003, %v1091
    %1093 = vmatmul.bf16.gmra.mxu0 %v189
    %v1094 = vpop.f32.mrf.mxu0
    %v1095 = vadd.f32 %v1006, %v1094
    %v1096 = vpop.f32.mrf.mxu0
    %v1097 = vadd.f32 %v1008, %v1096
    %1098 = vmatmul.bf16.gmra.mxu0 %v193
    %v1099 = vpop.f32.mrf.mxu0
    %v1100 = vadd.f32 %v1011, %v1099
    %v1101 = vpop.f32.mrf.mxu0
    %v1102 = vadd.f32 %v1013, %v1101
    %1103 = vmatmul.bf16.gmra.mxu0 %v197
    %v1104 = vpop.f32.mrf.mxu0
    %v1105 = vadd.f32 %v1016, %v1104
    %v1106 = vpop.f32.mrf.mxu0
    %v1107 = vadd.f32 %v1018, %v1106
    %1108 = vmatmul.bf16.gmra.mxu0 %v201
    %v1109 = vpop.f32.mrf.mxu0
    %v1110 = vadd.f32 %v1021, %v1109
    %v1111 = vpop.f32.mrf.mxu0
    %v1112 = vadd.f32 %v1023, %v1111
    %1113 = vmatmul.bf16.gmra.mxu0 %v205
    %v1114 = vpop.f32.mrf.mxu0
    %v1115 = vadd.f32 %v1026, %v1114
    %v1116 = vpop.f32.mrf.mxu0
    %v1117 = vadd.f32 %v1028, %v1116
    %1118 = vmatmul.bf16.gmra.mxu0 %v209
    %v1119 = vpop.f32.mrf.mxu0
    %v1120 = vadd.f32 %v1031, %v1119
    %v1121 = vpop.f32.mrf.mxu0
    %v1122 = vadd.f32 %v1033, %v1121
    %1123 = vmatmul.bf16.gmra.mxu0 %v213
    %v1124 = vpop.f32.mrf.mxu0
    %v1125 = vadd.f32 %v1036, %v1124
    %v1126 = vpop.f32.mrf.mxu0
    %v1127 = vadd.f32 %v1038, %v1126
    %1128 = vmatmul.bf16.gmra.mxu0 %v217
    %v1129 = vpop.f32.mrf.mxu0
    %v1130 = vadd.f32 %v1041, %v1129
    %v1131 = vpop.f32.mrf.mxu0
    %v1132 = vadd.f32 %v1043, %v1131
    %1133 = vmatmul.bf16.gmra.mxu0 %v221
    %v1134 = vpop.f32.mrf.mxu0
    %v1135 = vadd.f32 %v1046, %v1134
    %v1136 = vpop.f32.mrf.mxu0
    %v1137 = vadd.f32 %v1048, %v1136
    %1138 = vmatmul.bf16.gmra.mxu0 %v225
    %v1139 = vpop.f32.mrf.mxu0
    %v1140 = vadd.f32 %v1051, %v1139
    %v1141 = vpop.f32.mrf.mxu0
    %v1142 = vadd.f32 %v1053, %v1141
    %1143 = vmatmul.bf16.gmra.mxu0 %v229
    %v1144 = vpop.f32.mrf.mxu0
    %v1145 = vadd.f32 %v1056, %v1144
    %v1146 = vpop.f32.mrf.mxu0
    %v1147 = vadd.f32 %v1058, %v1146
    %1148 = vmatmul.bf16.gmra.mxu0 %v233
    %v1149 = vpop.f32.mrf.mxu0
    %v1150 = vadd.f32 %v1061, %v1149
    %v1151 = vpop.f32.mrf.mxu0
    %v1152 = vadd.f32 %v1063, %v1151
    %1153 = vdwg.mxu0
    %1154 = vmatpush.bf16.msra.mxu0 %v539
    %1155 = vmatpush.bf16.msra.mxu0 %v537
    %1156 = vmatpush.bf16.msra.mxu0 %v535
    %1157 = vmatpush.bf16.msra.mxu0 %v533
    %1158 = vmatpush.bf16.msra.mxu0 %v531
    %1159 = vmatpush.bf16.msra.mxu0 %v529
    %1160 = vmatpush.bf16.msra.mxu0 %v527
    %1161 = vmatpush.bf16.msra.mxu0 %v525
    %1162 = vmatmul.bf16.gmra.mxu0 %v174
    %v1163 = vpop.f32.mrf.mxu0
    %v1164 = vadd.f32 %v1075, %v1163
    %v1165 = vpop.f32.mrf.mxu0
    %v1166 = vadd.f32 %v1077, %v1165
    %1167 = vmatmul.bf16.gmra.mxu0 %v178
    %v1168 = vpop.f32.mrf.mxu0
    %v1169 = vadd.f32 %v1080, %v1168
    %v1170 = vpop.f32.mrf.mxu0
    %v1171 = vadd.f32 %v1082, %v1170
    %1172 = vmatmul.bf16.gmra.mxu0 %v182
    %v1173 = vpop.f32.mrf.mxu0
    %v1174 = vadd.f32 %v1085, %v1173
    %v1175 = vpop.f32.mrf.mxu0
    %v1176 = vadd.f32 %v1087, %v1175
    %1177 = vmatmul.bf16.gmra.mxu0 %v186
    %v1178 = vpop.f32.mrf.mxu0
    %v1179 = vadd.f32 %v1090, %v1178
    %v1180 = vpop.f32.mrf.mxu0
    %v1181 = vadd.f32 %v1092, %v1180
    %1182 = vmatmul.bf16.gmra.mxu0 %v190
    %v1183 = vpop.f32.mrf.mxu0
    %v1184 = vadd.f32 %v1095, %v1183
    %v1185 = vpop.f32.mrf.mxu0
    %v1186 = vadd.f32 %v1097, %v1185
    %1187 = vmatmul.bf16.gmra.mxu0 %v194
    %v1188 = vpop.f32.mrf.mxu0
    %v1189 = vadd.f32 %v1100, %v1188
    %v1190 = vpop.f32.mrf.mxu0
    %v1191 = vadd.f32 %v1102, %v1190
    %1192 = vmatmul.bf16.gmra.mxu0 %v198
    %v1193 = vpop.f32.mrf.mxu0
    %v1194 = vadd.f32 %v1105, %v1193
    %v1195 = vpop.f32.mrf.mxu0
    %v1196 = vadd.f32 %v1107, %v1195
    %1197 = vmatmul.bf16.gmra.mxu0 %v202
    %v1198 = vpop.f32.mrf.mxu0
    %v1199 = vadd.f32 %v1110, %v1198
    %v1200 = vpop.f32.mrf.mxu0
    %v1201 = vadd.f32 %v1112, %v1200
    %1202 = vmatmul.bf16.gmra.mxu0 %v206
    %v1203 = vpop.f32.mrf.mxu0
    %v1204 = vadd.f32 %v1115, %v1203
    %v1205 = vpop.f32.mrf.mxu0
    %v1206 = vadd.f32 %v1117, %v1205
    %1207 = vmatmul.bf16.gmra.mxu0 %v210
    %v1208 = vpop.f32.mrf.mxu0
    %v1209 = vadd.f32 %v1120, %v1208
    %v1210 = vpop.f32.mrf.mxu0
    %v1211 = vadd.f32 %v1122, %v1210
    %1212 = vmatmul.bf16.gmra.mxu0 %v214
    %v1213 = vpop.f32.mrf.mxu0
    %v1214 = vadd.f32 %v1125, %v1213
    %v1215 = vpop.f32.mrf.mxu0
    %v1216 = vadd.f32 %v1127, %v1215
    %1217 = vmatmul.bf16.gmra.mxu0 %v218
    %v1218 = vpop.f32.mrf.mxu0
    %v1219 = vadd.f32 %v1130, %v1218
    %v1220 = vpop.f32.mrf.mxu0
    %v1221 = vadd.f32 %v1132, %v1220
    %1222 = vmatmul.bf16.gmra.mxu0 %v222
    %v1223 = vpop.f32.mrf.mxu0
    %v1224 = vadd.f32 %v1135, %v1223
    %v1225 = vpop.f32.mrf.mxu0
    %v1226 = vadd.f32 %v1137, %v1225
    %1227 = vmatmul.bf16.gmra.mxu0 %v226
    %v1228 = vpop.f32.mrf.mxu0
    %v1229 = vadd.f32 %v1140, %v1228
    %v1230 = vpop.f32.mrf.mxu0
    %v1231 = vadd.f32 %v1142, %v1230
    %1232 = vmatmul.bf16.gmra.mxu0 %v230
    %v1233 = vpop.f32.mrf.mxu0
    %v1234 = vadd.f32 %v1145, %v1233
    %v1235 = vpop.f32.mrf.mxu0
    %v1236 = vadd.f32 %v1147, %v1235
    %1237 = vmatmul.bf16.gmra.mxu0 %v234
    %v1238 = vpop.f32.mrf.mxu0
    %v1239 = vadd.f32 %v1150, %v1238
    %v1240 = vpop.f32.mrf.mxu0
    %v1241 = vadd.f32 %v1152, %v1240
    %1242 = vdwg.mxu0
    %1243 = vmatpush.bf16.msra.mxu0 %v555
    %1244 = vmatpush.bf16.msra.mxu0 %v553
    %1245 = vmatpush.bf16.msra.mxu0 %v551
    %1246 = vmatpush.bf16.msra.mxu0 %v549
    %1247 = vmatpush.bf16.msra.mxu0 %v547
    %1248 = vmatpush.bf16.msra.mxu0 %v545
    %1249 = vmatpush.bf16.msra.mxu0 %v543
    %1250 = vmatpush.bf16.msra.mxu0 %v541
    %1251 = vmatmul.bf16.gmra.mxu0 %v175
    %v1252 = vpop.f32.mrf.mxu0
    %v1253 = vadd.f32 %v1164, %v1252
    %v1254 = vpop.f32.mrf.mxu0
    %v1255 = vadd.f32 %v1166, %v1254
    %1256 = vmatmul.bf16.gmra.mxu0 %v179
    %v1257 = vpop.f32.mrf.mxu0
    %v1258 = vadd.f32 %v1169, %v1257
    %v1259 = vpop.f32.mrf.mxu0
    %v1260 = vadd.f32 %v1171, %v1259
    %1261 = vmatmul.bf16.gmra.mxu0 %v183
    %v1262 = vpop.f32.mrf.mxu0
    %v1263 = vadd.f32 %v1174, %v1262
    %v1264 = vpop.f32.mrf.mxu0
    %v1265 = vadd.f32 %v1176, %v1264
    %1266 = vmatmul.bf16.gmra.mxu0 %v187
    %v1267 = vpop.f32.mrf.mxu0
    %v1268 = vadd.f32 %v1179, %v1267
    %v1269 = vpop.f32.mrf.mxu0
    %v1270 = vadd.f32 %v1181, %v1269
    %1271 = vmatmul.bf16.gmra.mxu0 %v191
    %v1272 = vpop.f32.mrf.mxu0
    %v1273 = vadd.f32 %v1184, %v1272
    %v1274 = vpop.f32.mrf.mxu0
    %v1275 = vadd.f32 %v1186, %v1274
    %1276 = vmatmul.bf16.gmra.mxu0 %v195
    %v1277 = vpop.f32.mrf.mxu0
    %v1278 = vadd.f32 %v1189, %v1277
    %v1279 = vpop.f32.mrf.mxu0
    %v1280 = vadd.f32 %v1191, %v1279
    %1281 = vmatmul.bf16.gmra.mxu0 %v199
    %v1282 = vpop.f32.mrf.mxu0
    %v1283 = vadd.f32 %v1194, %v1282
    %v1284 = vpop.f32.mrf.mxu0
    %v1285 = vadd.f32 %v1196, %v1284
    %1286 = vmatmul.bf16.gmra.mxu0 %v203
    %v1287 = vpop.f32.mrf.mxu0
    %v1288 = vadd.f32 %v1199, %v1287
    %v1289 = vpop.f32.mrf.mxu0
    %v1290 = vadd.f32 %v1201, %v1289
    %1291 = vmatmul.bf16.gmra.mxu0 %v207
    %v1292 = vpop.f32.mrf.mxu0
    %v1293 = vadd.f32 %v1204, %v1292
    %v1294 = vpop.f32.mrf.mxu0
    %v1295 = vadd.f32 %v1206, %v1294
    %1296 = vmatmul.bf16.gmra.mxu0 %v211
    %v1297 = vpop.f32.mrf.mxu0
    %v1298 = vadd.f32 %v1209, %v1297
    %v1299 = vpop.f32.mrf.mxu0
    %v1300 = vadd.f32 %v1211, %v1299
    %1301 = vmatmul.bf16.gmra.mxu0 %v215
    %v1302 = vpop.f32.mrf.mxu0
    %v1303 = vadd.f32 %v1214, %v1302
    %v1304 = vpop.f32.mrf.mxu0
    %v1305 = vadd.f32 %v1216, %v1304
    %1306 = vmatmul.bf16.gmra.mxu0 %v219
    %v1307 = vpop.f32.mrf.mxu0
    %v1308 = vadd.f32 %v1219, %v1307
    %v1309 = vpop.f32.mrf.mxu0
    %v1310 = vadd.f32 %v1221, %v1309
    %1311 = vmatmul.bf16.gmra.mxu0 %v223
    %v1312 = vpop.f32.mrf.mxu0
    %v1313 = vadd.f32 %v1224, %v1312
    %v1314 = vpop.f32.mrf.mxu0
    %v1315 = vadd.f32 %v1226, %v1314
    %1316 = vmatmul.bf16.gmra.mxu0 %v227
    %v1317 = vpop.f32.mrf.mxu0
    %v1318 = vadd.f32 %v1229, %v1317
    %v1319 = vpop.f32.mrf.mxu0
    %v1320 = vadd.f32 %v1231, %v1319
    %1321 = vmatmul.bf16.gmra.mxu0 %v231
    %v1322 = vpop.f32.mrf.mxu0
    %v1323 = vadd.f32 %v1234, %v1322
    %v1324 = vpop.f32.mrf.mxu0
    %v1325 = vadd.f32 %v1236, %v1324
    %1326 = vmatmul.bf16.gmra.mxu0 %v235
    %v1327 = vpop.f32.mrf.mxu0
    %v1328 = vadd.f32 %v1239, %v1327
    %v1329 = vpop.f32.mrf.mxu0
    %v1330 = vadd.f32 %v1241, %v1329
    %1331 = vdwg.mxu0
    %1332 = vst [vmem:[#allocation7] sm:$0xff] %v897
    %1333 = vst [vmem:[#allocation7 + $0x8] sm:$0xff] %v1253
    %1334 = vst [vmem:[#allocation7 + $0x10] sm:$0xff] %v899
    %1335 = vst [vmem:[#allocation7 + $0x18] sm:$0xff] %v1255
    %1336 = vst [vmem:[#allocation7 + $0x20] sm:$0xff] %v902
    %1337 = vst [vmem:[#allocation7 + $0x28] sm:$0xff] %v1258
    %1338 = vst [vmem:[#allocation7 + $0x30] sm:$0xff] %v904
    %1339 = vst [vmem:[#allocation7 + $0x38] sm:$0xff] %v1260
    %1340 = vst [vmem:[#allocation7 + $0x40] sm:$0xff] %v907
    %1341 = vst [vmem:[#allocation7 + $0x48] sm:$0xff] %v1263
    %1342 = vst [vmem:[#allocation7 + $0x50] sm:$0xff] %v909
    %1343 = vst [vmem:[#allocation7 + $0x58] sm:$0xff] %v1265
    %1344 = vst [vmem:[#allocation7 + $0x60] sm:$0xff] %v912
    %1345 = vst [vmem:[#allocation7 + $0x68] sm:$0xff] %v1268
    %1346 = vst [vmem:[#allocation7 + $0x70] sm:$0xff] %v914
    %1347 = vst [vmem:[#allocation7 + $0x78] sm:$0xff] %v1270
    %1348 = vst [vmem:[#allocation7 + $0x80] sm:$0xff] %v917
    %1349 = vst [vmem:[#allocation7 + $0x88] sm:$0xff] %v1273
    %1350 = vst [vmem:[#allocation7 + $0x90] sm:$0xff] %v919
    %1351 = vst [vmem:[#allocation7 + $0x98] sm:$0xff] %v1275
    %1352 = vst [vmem:[#allocation7 + $0xa0] sm:$0xff] %v922
    %1353 = vst [vmem:[#allocation7 + $0xa8] sm:$0xff] %v1278
    %1354 = vst [vmem:[#allocation7 + $0xb0] sm:$0xff] %v924
    %1355 = vst [vmem:[#allocation7 + $0xb8] sm:$0xff] %v1280
    %1356 = vst [vmem:[#allocation7 + $0xc0] sm:$0xff] %v927
    %1357 = vst [vmem:[#allocation7 + $0xc8] sm:$0xff] %v1283
    %1358 = vst [vmem:[#allocation7 + $0xd0] sm:$0xff] %v929
    %1359 = vst [vmem:[#allocation7 + $0xd8] sm:$0xff] %v1285
    %1360 = vst [vmem:[#allocation7 + $0xe0] sm:$0xff] %v932
    %1361 = vst [vmem:[#allocation7 + $0xe8] sm:$0xff] %v1288
    %1362 = vst [vmem:[#allocation7 + $0xf0] sm:$0xff] %v934
    %1363 = vst [vmem:[#allocation7 + $0xf8] sm:$0xff] %v1290
    %1364 = vst [vmem:[#allocation7 + $0x100] sm:$0xff] %v937
    %1365 = vst [vmem:[#allocation7 + $0x108] sm:$0xff] %v1293
    %1366 = vst [vmem:[#allocation7 + $0x110] sm:$0xff] %v939
    %1367 = vst [vmem:[#allocation7 + $0x118] sm:$0xff] %v1295
    %1368 = vst [vmem:[#allocation7 + $0x120] sm:$0xff] %v942
    %1369 = vst [vmem:[#allocation7 + $0x128] sm:$0xff] %v1298
    %1370 = vst [vmem:[#allocation7 + $0x130] sm:$0xff] %v944
    %1371 = vst [vmem:[#allocation7 + $0x138] sm:$0xff] %v1300
    %1372 = vst [vmem:[#allocation7 + $0x140] sm:$0xff] %v947
    %1373 = vst [vmem:[#allocation7 + $0x148] sm:$0xff] %v1303
    %1374 = vst [vmem:[#allocation7 + $0x150] sm:$0xff] %v949
    %1375 = vst [vmem:[#allocation7 + $0x158] sm:$0xff] %v1305
    %1376 = vst [vmem:[#allocation7 + $0x160] sm:$0xff] %v952
    %1377 = vst [vmem:[#allocation7 + $0x168] sm:$0xff] %v1308
    %1378 = vst [vmem:[#allocation7 + $0x170] sm:$0xff] %v954
    %1379 = vst [vmem:[#allocation7 + $0x178] sm:$0xff] %v1310
    %1380 = vst [vmem:[#allocation7 + $0x180] sm:$0xff] %v957
    %1381 = vst [vmem:[#allocation7 + $0x188] sm:$0xff] %v1313
    %1382 = vst [vmem:[#allocation7 + $0x190] sm:$0xff] %v959
    %1383 = vst [vmem:[#allocation7 + $0x198] sm:$0xff] %v1315
    %1384 = vst [vmem:[#allocation7 + $0x1a0] sm:$0xff] %v962
    %1385 = vst [vmem:[#allocation7 + $0x1a8] sm:$0xff] %v1318
    %1386 = vst [vmem:[#allocation7 + $0x1b0] sm:$0xff] %v964
    %1387 = vst [vmem:[#allocation7 + $0x1b8] sm:$0xff] %v1320
    %1388 = vst [vmem:[#allocation7 + $0x1c0] sm:$0xff] %v967
    %1389 = vst [vmem:[#allocation7 + $0x1c8] sm:$0xff] %v1323
    %1390 = vst [vmem:[#allocation7 + $0x1d0] sm:$0xff] %v969
    %1391 = vst [vmem:[#allocation7 + $0x1d8] sm:$0xff] %v1325
    %1392 = vst [vmem:[#allocation7 + $0x1e0] sm:$0xff] %v972
    %1393 = vst [vmem:[#allocation7 + $0x1e8] sm:$0xff] %v1328
    %1394 = vst [vmem:[#allocation7 + $0x1f0] sm:$0xff] %v974
    %1395 = vst [vmem:[#allocation7 + $0x1f8] sm:$0xff] %v1330
    // Predicated region
    $region18: #{tpu_custom_call.1} parent=1 // pred_check
      _
    $region19: #{tpu_custom_call.1} parent=1 // pred_check_branch
      %1397 = sbr.rel (0) target = $region21
    $region20: #{tpu_custom_call.1} parent=1 // pred_region
      %1399 = vsyncadd [#allocation4], 0
      %s1400 = sshll.u32 [#allocation7], 4
      %s1401 = int_to_ptr.vmem [resolvable:$true] %s1400
      %s1402 = sshll.u32 %s2, 4
      %s1403 = int_to_ptr.hbm [resolvable:$true] %s1402
      %1408 = dma.vmem_to_hbm [thread:$0]  %s1401, 8192, %s1403, [#allocation4], 256, 256, 16
    $region21: #{tpu_custom_call.1} parent=1 // pred_fallthru
      _
    // Predicated region
    $region22: #{tpu_custom_call.1} parent=1 // pred_check
      _
    $region23: #{tpu_custom_call.1} parent=1 // pred_check_branch
      %1410 = sbr.rel (0) target = $region25
    $region24: #{tpu_custom_call.1} parent=1 // pred_region
      %1412 = dma.done [#allocation4], 8192
    $region25: #{tpu_custom_call.1} parent=1 // pred_fallthru
      _
    %1413 = vsyncpa [#allocation3], 1
    %1414 = vsyncpa [#allocation6], 1
    %1415 = vsyncpa [#allocation4], 1

</llo_original>
